<compile_context>
chip_gen: v5e
topology: v5e:2x2
jax: 0.10.0
libtpu: 0.0.40
codegen_flags: <defaults>
</compile_context>

<pallas_src>
import functools

import jax
import jax.numpy as jnp
from jax.experimental import pallas as pl
from jax.experimental.pallas import tpu as pltpu


# ----------------------------------------------------------------------------
# In-kernel helpers
# ----------------------------------------------------------------------------
def _bn_train(x, gamma, beta, eps, relu):
    """Train-mode BatchNorm over the lane axis (per-channel batch stats)."""
    m = jnp.mean(x, axis=1, keepdims=True)
    v = jnp.mean(jnp.square(x - m), axis=1, keepdims=True)
    y = (x - m) * jax.lax.rsqrt(v + eps) * gamma + beta
    return jnp.maximum(y, 0.0) if relu else y


# ----------------------------------------------------------------------------
# Kernels (channel-major, lane-dense: shapes are (C, M))
# ----------------------------------------------------------------------------
def conv1_kernel(x_ref, g1_ref, b1_ref, w1_ref, g2_ref, b2_ref, o_ref):
    """BN1(train)+ReLU -> 1x1 conv -> BN2(train)+ReLU (pre-activation of conv2)."""
    t = _bn_train(x_ref[...], g1_ref[...], b1_ref[...], 1e-3, relu=True)
    y = jnp.dot(w1_ref[...], t, preferred_element_type=jnp.float32)   # (chnl, M)
    o_ref[...] = _bn_train(y, g2_ref[...], b2_ref[...], 1e-3, relu=True)


def tail_proj_kernel(cat_chnl, p_ref, w32_ref, g3_ref, b3_ref,
                     xs_ref, ws_ref, gs_ref, bs_ref, o_ref):
    """(conv3 @ grouped-conv) fused matmul -> BN3 -> projection shortcut
    (1x1 conv + BN) -> dual-path add -> ReLU (single full-tile store)."""
    y3 = jnp.dot(w32_ref[...], p_ref[...], preferred_element_type=jnp.float32)
    out3 = _bn_train(y3, g3_ref[...], b3_ref[...], 1e-5, relu=False)

    ysc = jnp.dot(ws_ref[...], xs_ref[...], preferred_element_type=jnp.float32)
    sc = _bn_train(ysc, gs_ref[...], bs_ref[...], 1e-5, relu=False)
    if cat_chnl > 0:   # zero-pad shortcut over the "cat" channels (sublane concat)
        sc = jnp.concatenate(
            [sc, jnp.zeros((cat_chnl, sc.shape[1]), sc.dtype)], axis=0)

    o_ref[...] = jnp.maximum(out3 + sc, 0.0)


def tail_id_kernel(cat_chnl, p_ref, w32_ref, g3_ref, b3_ref, xs_ref, o_ref):
    """Same as above with the identity shortcut."""
    y3 = jnp.dot(w32_ref[...], p_ref[...], preferred_element_type=jnp.float32)
    out3 = _bn_train(y3, g3_ref[...], b3_ref[...], 1e-5, relu=False)

    sc = xs_ref[...]
    if cat_chnl > 0:
        sc = jnp.concatenate(
            [sc, jnp.zeros((cat_chnl, sc.shape[1]), sc.dtype)], axis=0)

    o_ref[...] = jnp.maximum(out3 + sc, 0.0)


# ----------------------------------------------------------------------------
# pallas_call helper: whole arrays resident in VMEM (shapes are tiny)
# ----------------------------------------------------------------------------
def _full_spec(shape):
    nd = len(shape)
    return pl.BlockSpec(shape, lambda i, _nd=nd: (0,) * _nd)


def _call(kernel, out_shape, *args):
    return pl.pallas_call(
        kernel,
        out_shape=jax.ShapeDtypeStruct(out_shape, jnp.float32),
        grid=(1,),
        in_specs=[_full_spec(a.shape) for a in args],
        out_specs=_full_spec(out_shape),
        compiler_params=pltpu.CompilerParams(dimension_semantics=("arbitrary",)),
    )(*args)


# ----------------------------------------------------------------------------
# Forward pass (layout + im2col glue; everything else lives in the two kernels)
# ----------------------------------------------------------------------------
def dpn_block_forward(x_nchw, kp, *, add_chnl, cat_chnl, cardinality, d, stride):
    N, Cin, H, W = x_nchw.shape
    chnl = cardinality * d
    outc = add_chnl + cat_chnl
    M = N * H * W

    x_cm = jnp.transpose(x_nchw, (1, 0, 2, 3))               # (Cin, N, H, W)
    x_flat = x_cm.reshape(Cin, M)                            # lane-dense (C, M)

    # --- kernel 1: BN1+ReLU -> conv1 (1x1) -> BN2+ReLU ------------------------
    out1 = _call(conv1_kernel, (chnl, M),
                 x_flat, kp["g1"], kp["b1"], kp["w1k"], kp["g2"], kp["b2"])

    # --- im2col for the 3x3 grouped conv (tiny XLA glue, ~64 KiB) -------------
    # TODO(synk): for production shapes move the im2col into the kernel with a
    # tiled-M grid; for these toy sizes the XLA pad+slice+concat is negligible.
    Ho = (H + 2 - 3) // stride + 1
    Wo = (W + 2 - 3) // stride + 1
    M2 = N * Ho * Wo
    a_pad = jnp.pad(out1.reshape(chnl, N, H, W), ((0, 0), (0, 0), (1, 1), (1, 1)))
    wins = []
    for dy in range(3):
        for dx in range(3):
            wins.append(
                a_pad[:, :,
                      dy:dy + (Ho - 1) * stride + 1:stride,
                      dx:dx + (Wo - 1) * stride + 1:stride].reshape(chnl, M2))
    p = jnp.concatenate(wins, axis=0)                        # (9*chnl, M2), row = k*chnl+ci

    # shortcut input: a 1x1 conv with stride just subsamples the spatial grid
    x_s = x_cm[:, :, ::stride, ::stride].reshape(Cin, M2)

    # --- kernel 2: fused (conv2∘conv3) matmul + BN3 + shortcut + add + ReLU ----
    if "wsk" in kp:   # projection shortcut (add_chnl != in_chnls)
        out = _call(functools.partial(tail_proj_kernel, cat_chnl), (outc, M2),
                    p, kp["w32k"], kp["g3"], kp["beta3"],
                    x_s, kp["wsk"], kp["gs"], kp["betas"])
    else:             # identity shortcut
        out = _call(functools.partial(tail_id_kernel, cat_chnl), (outc, M2),
                    p, kp["w32k"], kp["g3"], kp["beta3"], x_s)

    return jnp.transpose(out.reshape(outc, N, Ho, Wo), (1, 0, 2, 3))   # NCHW


# ----------------------------------------------------------------------------
# Parameters: torch-layout init + one-time packing into kernel layouts
# ----------------------------------------------------------------------------
def init_params(key, in_chnls, add_chnl, cat_chnl, cardinality, d):
    chnl = cardinality * d
    outc = add_chnl + cat_chnl
    ks = jax.random.split(key, 4)

    def w_init(k, shape, fan_in):
        return jax.random.normal(k, shape, jnp.float32) / jnp.sqrt(float(fan_in))

    params = dict(
        g1=jnp.linspace(0.8, 1.2, in_chnls, dtype=jnp.float32),
        b1=jnp.linspace(-0.1, 0.1, in_chnls, dtype=jnp.float32),
        w1=w_init(ks[0], (chnl, in_chnls, 1, 1), in_chnls),      # conv1 1x1, no bias
        g2=jnp.linspace(0.9, 1.1, chnl, dtype=jnp.float32),
        b2=jnp.linspace(-0.05, 0.05, chnl, dtype=jnp.float32),
        w2=w_init(ks[1], (chnl, d, 3, 3), 9 * d),                # conv2 grouped 3x3, no bias
        w3=w_init(ks[2], (outc, chnl, 1, 1), chnl),              # conv3 1x1 (has bias)
        bias3=0.01 * jnp.arange(outc, dtype=jnp.float32),
        g3=jnp.linspace(0.95, 1.05, outc, dtype=jnp.float32),
        beta3=jnp.zeros((outc,), jnp.float32),
    )
    if add_chnl != in_chnls:                                     # shortcut conv + BN
        params.update(
            ws=w_init(ks[3], (add_chnl, in_chnls, 1, 1), in_chnls),
            bs=0.02 * jnp.arange(add_chnl, dtype=jnp.float32),
            gs=jnp.linspace(0.9, 1.1, add_chnl, dtype=jnp.float32),
            betas=jnp.zeros((add_chnl,), jnp.float32),
        )
    return params


def prepare_params(params, cardinality, d):
    """One-time packing of torch-layout weights into kernel layouts (hoisted
    out of the forward).

    * The grouped 3x3 conv is flattened to a block-diagonal (chnl, 9*chnl)
      matrix and then folded with the 1x1 conv3 weight (no nonlinearity between
      conv2's conv and conv3), so kernel 2 does a single matmul.
    * Conv biases that feed directly into a train-mode BN are dropped: the BN
      mean subtraction cancels them exactly."""
    chnl = cardinality * d
    col = lambda v: jnp.asarray(v, jnp.float32).reshape(-1, 1)

    # Block-diagonal flattened weight for the grouped 3x3 conv:
    # w2k[o, k*chnl + ci] = w2[o, ci - g*d, dy, dx] if ci is in o's group, else 0.
    w2 = params["w2"]
    w2k = jnp.zeros((chnl, 9, chnl), jnp.float32)
    for g in range(cardinality):
        blk = jnp.transpose(w2[g * d:(g + 1) * d], (0, 2, 3, 1)).reshape(d, 9, d)
        w2k = w2k.at[g * d:(g + 1) * d, :, g * d:(g + 1) * d].set(blk)
    w2k = w2k.reshape(chnl, 9 * chnl)

    w3k = params["w3"][:, :, 0, 0]                              # (outc, chnl)
    w32k = jnp.dot(w3k, w2k, precision=jax.lax.Precision.HIGHEST)  # (outc, 9*chnl)

    kp = dict(
        g1=col(params["g1"]), b1=col(params["b1"]),
        w1k=params["w1"][:, :, 0, 0],                  # (chnl, Cin)
        g2=col(params["g2"]), b2=col(params["b2"]),
        w32k=w32k,                                     # conv3 folded into grouped conv
        g3=col(params["g3"]), beta3=col(params["beta3"]),
    )
    if "ws" in params:
        kp.update(wsk=params["ws"][:, :, 0, 0],        # (add, Cin)
                  gs=col(params["gs"]), betas=col(params["betas"]))
    return kp


# ----------------------------------------------------------------------------
# Pure-JAX reference (independent NCHW implementation, for self-check)
# ----------------------------------------------------------------------------
def _bn_train_ref(x, gamma, beta, eps):
    m = jnp.mean(x, axis=(0, 2, 3), keepdims=True)
    v = jnp.mean(jnp.square(x - m), axis=(0, 2, 3), keepdims=True)
    return ((x - m) * jax.lax.rsqrt(v + eps) * gamma.reshape(1, -1, 1, 1)
            + beta.reshape(1, -1, 1, 1))


def _conv2d_ref(x, w, stride=1, padding=0, groups=1, bias=None):
    out = jax.lax.conv_general_dilated(
        x, w, window_strides=(stride, stride),
        padding=((padding, padding), (padding, padding)),
        feature_group_count=groups,
        dimension_numbers=("NCHW", "OIHW", "NCHW"),
        precision=jax.lax.Precision.HIGHEST)
    if bias is not None:
        out = out + bias.reshape(1, -1, 1, 1)
    return out


def dpn_block_reference(x, p, *, add_chnl, cardinality, stride):
    out = _conv2d_ref(jax.nn.relu(_bn_train_ref(x, p["g1"], p["b1"], 1e-3)), p["w1"])
    out = _conv2d_ref(jax.nn.relu(_bn_train_ref(out, p["g2"], p["b2"], 1e-3)),
                      p["w2"], stride=stride, padding=1, groups=cardinality)
    out = _bn_train_ref(_conv2d_ref(out, p["w3"], bias=p["bias3"]),
                        p["g3"], p["beta3"], 1e-5)
    if "ws" in p:
        sc = _bn_train_ref(_conv2d_ref(x, p["ws"], stride=stride, bias=p["bs"]),
                           p["gs"], p["betas"], 1e-5)
    else:
        sc = x
    add = out[:, :add_chnl] + sc
    return jax.nn.relu(jnp.concatenate([add, out[:, add_chnl:]], axis=1))


# ----------------------------------------------------------------------------
if __name__ == "__main__":
    # DPN_Block(in_chnls=16, add_chnl=8, cat_chnl=8, cardinality=2, d=8, stride=2)
    N, in_chnls, H, W = 2, 16, 16, 16
    add_chnl, cat_chnl, cardinality, d, stride = 8, 8, 2, 8, 2

    key = jax.random.PRNGKey(0)
    kx, kparam = jax.random.split(key)
    x = jax.random.normal(kx, (N, in_chnls, H, W), jnp.float32)      # NCHW like PyTorch
    params = init_params(kparam, in_chnls, add_chnl, cat_chnl, cardinality, d)
    kparams = prepare_params(params, cardinality, d)                 # one-time packing

    fwd = jax.jit(functools.partial(
        dpn_block_forward, add_chnl=add_chnl, cat_chnl=cat_chnl,
        cardinality=cardinality, d=d, stride=stride))
    out = jax.block_until_ready(fwd(x, kparams))

    Ho = (H + 2 - 3) // stride + 1
    assert out.shape == (N, add_chnl + cat_chnl, Ho, Ho)
    assert bool(jnp.all(jnp.isfinite(out))) and bool(jnp.all(out >= 0.0))

    # Self-check against an independent pure-JAX NCHW reference (loose tol to
    # absorb TPU matmul-precision differences; layout bugs would be O(1) off).
    ref = dpn_block_reference(x, params, add_chnl=add_chnl,
                              cardinality=cardinality, stride=stride)
    assert float(jnp.max(jnp.abs(out - ref))) < 1e-1, "mismatch vs reference"

    print("KERNEL_OK")
</pallas_src>

<mosaic_0001>
module attributes {stable_mosaic.version = 11 : i64} {
  func.func @conv1_kernel(%arg0: i32, %arg1: memref<16x512xf32, #tpu.memory_space<vmem>>, %arg2: memref<16x1xf32, #tpu.memory_space<vmem>>, %arg3: memref<16x1xf32, #tpu.memory_space<vmem>>, %arg4: memref<16x16xf32, #tpu.memory_space<vmem>>, %arg5: memref<16x1xf32, #tpu.memory_space<vmem>>, %arg6: memref<16x1xf32, #tpu.memory_space<vmem>>, %arg7: memref<16x512xf32, #tpu.memory_space<vmem>>) attributes {dimension_semantics = [#tpu.dimension_semantics<arbitrary>], iteration_bounds = array<i64: 1>, scalar_prefetch = 0 : i64, scratch_operands = 0 : i64, tpu.core_type = #tpu.core_type<tc>, window_params = [{pipeline_mode = #tpu.pipeline_mode<synchronous>, transform_indices = @transform_0, window_bounds = array<i64: 16, 512>}, {pipeline_mode = #tpu.pipeline_mode<synchronous>, transform_indices = @transform_1, window_bounds = array<i64: 16, 1>}, {pipeline_mode = #tpu.pipeline_mode<synchronous>, transform_indices = @transform_2, window_bounds = array<i64: 16, 1>}, {pipeline_mode = #tpu.pipeline_mode<synchronous>, transform_indices = @transform_3, window_bounds = array<i64: 16, 16>}, {pipeline_mode = #tpu.pipeline_mode<synchronous>, transform_indices = @transform_4, window_bounds = array<i64: 16, 1>}, {pipeline_mode = #tpu.pipeline_mode<synchronous>, transform_indices = @transform_5, window_bounds = array<i64: 16, 1>}, {pipeline_mode = #tpu.pipeline_mode<synchronous>, transform_indices = @transform_6, window_bounds = array<i64: 16, 512>}]} {
    %c0 = arith.constant 0 : index
    %c0_0 = arith.constant 0 : index
    %0 = vector.load %arg1[%c0, %c0_0] : memref<16x512xf32, #tpu.memory_space<vmem>>, vector<16x512xf32>
    %c0_1 = arith.constant 0 : index
    %c0_2 = arith.constant 0 : index
    %1 = vector.load %arg2[%c0_1, %c0_2] : memref<16x1xf32, #tpu.memory_space<vmem>>, vector<16x1xf32>
    %c0_3 = arith.constant 0 : index
    %c0_4 = arith.constant 0 : index
    %2 = vector.load %arg3[%c0_3, %c0_4] : memref<16x1xf32, #tpu.memory_space<vmem>>, vector<16x1xf32>
    %cst = arith.constant dense<0.000000e+00> : vector<16xf32>
    %3 = vector.multi_reduction <add>, %0, %cst [1] : vector<16x512xf32> to vector<16xf32>
    %4 = vector.shape_cast %3 : vector<16xf32> to vector<16x1xf32>
    %cst_5 = arith.constant 5.120000e+02 : f32
    %5 = vector.broadcast %cst_5 : f32 to vector<16x1xf32>
    %6 = arith.divf %4, %5 : vector<16x1xf32>
    %7 = vector.broadcast %6 : vector<16x1xf32> to vector<16x512xf32>
    %8 = arith.subf %0, %7 : vector<16x512xf32>
    %9 = arith.mulf %8, %8 : vector<16x512xf32>
    %cst_6 = arith.constant dense<0.000000e+00> : vector<16xf32>
    %10 = vector.multi_reduction <add>, %9, %cst_6 [1] : vector<16x512xf32> to vector<16xf32>
    %11 = vector.shape_cast %10 : vector<16xf32> to vector<16x1xf32>
    %cst_7 = arith.constant 5.120000e+02 : f32
    %12 = vector.broadcast %cst_7 : f32 to vector<16x1xf32>
    %13 = arith.divf %11, %12 : vector<16x1xf32>
    %14 = vector.broadcast %6 : vector<16x1xf32> to vector<16x512xf32>
    %15 = arith.subf %0, %14 : vector<16x512xf32>
    %cst_8 = arith.constant 1.000000e-03 : f32
    %16 = vector.broadcast %cst_8 : f32 to vector<16x1xf32>
    %17 = arith.addf %13, %16 : vector<16x1xf32>
    %18 = math.rsqrt %17 : vector<16x1xf32>
    %19 = vector.broadcast %18 : vector<16x1xf32> to vector<16x512xf32>
    %20 = arith.mulf %15, %19 : vector<16x512xf32>
    %21 = vector.broadcast %1 : vector<16x1xf32> to vector<16x512xf32>
    %22 = arith.mulf %20, %21 : vector<16x512xf32>
    %23 = vector.broadcast %2 : vector<16x1xf32> to vector<16x512xf32>
    %24 = arith.addf %22, %23 : vector<16x512xf32>
    %cst_9 = arith.constant 0.000000e+00 : f32
    %25 = vector.broadcast %cst_9 : f32 to vector<16x512xf32>
    %26 = arith.maximumf %24, %25 : vector<16x512xf32>
    %c0_10 = arith.constant 0 : index
    %c0_11 = arith.constant 0 : index
    %27 = vector.load %arg4[%c0_10, %c0_11] : memref<16x16xf32, #tpu.memory_space<vmem>>, vector<16x16xf32>
    %cst_12 = arith.constant dense<0.000000e+00> : vector<16x512xf32>
    %28 = tpu.matmul %27, %26, %cst_12 {dimension_numbers = #tpu.dot_dimension_numbers<[1], [0], [0], [1], [0, 0, 1, 1], [], []>} : vector<16x16xf32>, vector<16x512xf32>, vector<16x512xf32> -> vector<16x512xf32>
    %c0_13 = arith.constant 0 : index
    %c0_14 = arith.constant 0 : index
    %29 = vector.load %arg5[%c0_13, %c0_14] : memref<16x1xf32, #tpu.memory_space<vmem>>, vector<16x1xf32>
    %c0_15 = arith.constant 0 : index
    %c0_16 = arith.constant 0 : index
    %30 = vector.load %arg6[%c0_15, %c0_16] : memref<16x1xf32, #tpu.memory_space<vmem>>, vector<16x1xf32>
    %cst_17 = arith.constant dense<0.000000e+00> : vector<16xf32>
    %31 = vector.multi_reduction <add>, %28, %cst_17 [1] : vector<16x512xf32> to vector<16xf32>
    %32 = vector.shape_cast %31 : vector<16xf32> to vector<16x1xf32>
    %cst_18 = arith.constant 5.120000e+02 : f32
    %33 = vector.broadcast %cst_18 : f32 to vector<16x1xf32>
    %34 = arith.divf %32, %33 : vector<16x1xf32>
    %35 = vector.broadcast %34 : vector<16x1xf32> to vector<16x512xf32>
    %36 = arith.subf %28, %35 : vector<16x512xf32>
    %37 = arith.mulf %36, %36 : vector<16x512xf32>
    %cst_19 = arith.constant dense<0.000000e+00> : vector<16xf32>
    %38 = vector.multi_reduction <add>, %37, %cst_19 [1] : vector<16x512xf32> to vector<16xf32>
    %39 = vector.shape_cast %38 : vector<16xf32> to vector<16x1xf32>
    %cst_20 = arith.constant 5.120000e+02 : f32
    %40 = vector.broadcast %cst_20 : f32 to vector<16x1xf32>
    %41 = arith.divf %39, %40 : vector<16x1xf32>
    %42 = vector.broadcast %34 : vector<16x1xf32> to vector<16x512xf32>
    %43 = arith.subf %28, %42 : vector<16x512xf32>
    %cst_21 = arith.constant 1.000000e-03 : f32
    %44 = vector.broadcast %cst_21 : f32 to vector<16x1xf32>
    %45 = arith.addf %41, %44 : vector<16x1xf32>
    %46 = math.rsqrt %45 : vector<16x1xf32>
    %47 = vector.broadcast %46 : vector<16x1xf32> to vector<16x512xf32>
    %48 = arith.mulf %43, %47 : vector<16x512xf32>
    %49 = vector.broadcast %29 : vector<16x1xf32> to vector<16x512xf32>
    %50 = arith.mulf %48, %49 : vector<16x512xf32>
    %51 = vector.broadcast %30 : vector<16x1xf32> to vector<16x512xf32>
    %52 = arith.addf %50, %51 : vector<16x512xf32>
    %cst_22 = arith.constant 0.000000e+00 : f32
    %53 = vector.broadcast %cst_22 : f32 to vector<16x512xf32>
    %54 = arith.maximumf %52, %53 : vector<16x512xf32>
    %c0_23 = arith.constant 0 : index
    %c0_24 = arith.constant 0 : index
    %55 = vector.load %arg7[%c0_23, %c0_24] : memref<16x512xf32, #tpu.memory_space<vmem>>, vector<16x512xf32>
    tpu.vector_store %arg7[%c0_23, %c0_24], %54 {strides = array<i32>} : memref<16x512xf32, #tpu.memory_space<vmem>>, vector<16x512xf32>,
    return
  }
  func.func @transform_0(%arg0: i32) -> (i32, i32) {
    %c0_i32 = arith.constant 0 : i32
    %c0_i32_0 = arith.constant 0 : i32
    %c0_i32_1 = arith.constant 0 : i32
    return %c0_i32, %c0_i32_0 : i32, i32
  }
  func.func @transform_1(%arg0: i32) -> (i32, i32) {
    %c0_i32 = arith.constant 0 : i32
    %c0_i32_0 = arith.constant 0 : i32
    %c0_i32_1 = arith.constant 0 : i32
    return %c0_i32, %c0_i32_0 : i32, i32
  }
  func.func @transform_2(%arg0: i32) -> (i32, i32) {
    %c0_i32 = arith.constant 0 : i32
    %c0_i32_0 = arith.constant 0 : i32
    %c0_i32_1 = arith.constant 0 : i32
    return %c0_i32, %c0_i32_0 : i32, i32
  }
  func.func @transform_3(%arg0: i32) -> (i32, i32) {
    %c0_i32 = arith.constant 0 : i32
    %c0_i32_0 = arith.constant 0 : i32
    %c0_i32_1 = arith.constant 0 : i32
    return %c0_i32, %c0_i32_0 : i32, i32
  }
  func.func @transform_4(%arg0: i32) -> (i32, i32) {
    %c0_i32 = arith.constant 0 : i32
    %c0_i32_0 = arith.constant 0 : i32
    %c0_i32_1 = arith.constant 0 : i32
    return %c0_i32, %c0_i32_0 : i32, i32
  }
  func.func @transform_5(%arg0: i32) -> (i32, i32) {
    %c0_i32 = arith.constant 0 : i32
    %c0_i32_0 = arith.constant 0 : i32
    %c0_i32_1 = arith.constant 0 : i32
    return %c0_i32, %c0_i32_0 : i32, i32
  }
  func.func @transform_6(%arg0: i32) -> (i32, i32) {
    %c0_i32 = arith.constant 0 : i32
    %c0_i32_0 = arith.constant 0 : i32
    %c0_i32_1 = arith.constant 0 : i32
    return %c0_i32, %c0_i32_0 : i32, i32
  }
}

module attributes {stable_mosaic.version = 11 : i64} {
  func.func @tail_proj_kernel(%arg0: i32, %arg1: memref<144x128xf32, #tpu.memory_space<vmem>>, %arg2: memref<16x144xf32, #tpu.memory_space<vmem>>, %arg3: memref<16x1xf32, #tpu.memory_space<vmem>>, %arg4: memref<16x1xf32, #tpu.memory_space<vmem>>, %arg5: memref<16x128xf32, #tpu.memory_space<vmem>>, %arg6: memref<8x16xf32, #tpu.memory_space<vmem>>, %arg7: memref<8x1xf32, #tpu.memory_space<vmem>>, %arg8: memref<8x1xf32, #tpu.memory_space<vmem>>, %arg9: memref<16x128xf32, #tpu.memory_space<vmem>>) attributes {dimension_semantics = [#tpu.dimension_semantics<arbitrary>], iteration_bounds = array<i64: 1>, scalar_prefetch = 0 : i64, scratch_operands = 0 : i64, tpu.core_type = #tpu.core_type<tc>, window_params = [{pipeline_mode = #tpu.pipeline_mode<synchronous>, transform_indices = @transform_0, window_bounds = array<i64: 144, 128>}, {pipeline_mode = #tpu.pipeline_mode<synchronous>, transform_indices = @transform_1, window_bounds = array<i64: 16, 144>}, {pipeline_mode = #tpu.pipeline_mode<synchronous>, transform_indices = @transform_2, window_bounds = array<i64: 16, 1>}, {pipeline_mode = #tpu.pipeline_mode<synchronous>, transform_indices = @transform_3, window_bounds = array<i64: 16, 1>}, {pipeline_mode = #tpu.pipeline_mode<synchronous>, transform_indices = @transform_4, window_bounds = array<i64: 16, 128>}, {pipeline_mode = #tpu.pipeline_mode<synchronous>, transform_indices = @transform_5, window_bounds = array<i64: 8, 16>}, {pipeline_mode = #tpu.pipeline_mode<synchronous>, transform_indices = @transform_6, window_bounds = array<i64: 8, 1>}, {pipeline_mode = #tpu.pipeline_mode<synchronous>, transform_indices = @transform_7, window_bounds = array<i64: 8, 1>}, {pipeline_mode = #tpu.pipeline_mode<synchronous>, transform_indices = @transform_8, window_bounds = array<i64: 16, 128>}]} {
    %c0 = arith.constant 0 : index
    %c0_0 = arith.constant 0 : index
    %0 = vector.load %arg2[%c0, %c0_0] : memref<16x144xf32, #tpu.memory_space<vmem>>, vector<16x144xf32>
    %c0_1 = arith.constant 0 : index
    %c0_2 = arith.constant 0 : index
    %1 = vector.load %arg1[%c0_1, %c0_2] : memref<144x128xf32, #tpu.memory_space<vmem>>, vector<144x128xf32>
    %cst = arith.constant dense<0.000000e+00> : vector<16x128xf32>
    %2 = tpu.matmul %0, %1, %cst {dimension_numbers = #tpu.dot_dimension_numbers<[1], [0], [0], [1], [0, 0, 1, 1], [], []>} : vector<16x144xf32>, vector<144x128xf32>, vector<16x128xf32> -> vector<16x128xf32>
    %c0_3 = arith.constant 0 : index
    %c0_4 = arith.constant 0 : index
    %3 = vector.load %arg3[%c0_3, %c0_4] : memref<16x1xf32, #tpu.memory_space<vmem>>, vector<16x1xf32>
    %c0_5 = arith.constant 0 : index
    %c0_6 = arith.constant 0 : index
    %4 = vector.load %arg4[%c0_5, %c0_6] : memref<16x1xf32, #tpu.memory_space<vmem>>, vector<16x1xf32>
    %cst_7 = arith.constant dense<0.000000e+00> : vector<16xf32>
    %5 = vector.multi_reduction <add>, %2, %cst_7 [1] : vector<16x128xf32> to vector<16xf32>
    %6 = vector.shape_cast %5 : vector<16xf32> to vector<16x1xf32>
    %cst_8 = arith.constant 1.280000e+02 : f32
    %7 = vector.broadcast %cst_8 : f32 to vector<16x1xf32>
    %8 = arith.divf %6, %7 : vector<16x1xf32>
    %9 = vector.broadcast %8 : vector<16x1xf32> to vector<16x128xf32>
    %10 = arith.subf %2, %9 : vector<16x128xf32>
    %11 = arith.mulf %10, %10 : vector<16x128xf32>
    %cst_9 = arith.constant dense<0.000000e+00> : vector<16xf32>
    %12 = vector.multi_reduction <add>, %11, %cst_9 [1] : vector<16x128xf32> to vector<16xf32>
    %13 = vector.shape_cast %12 : vector<16xf32> to vector<16x1xf32>
    %cst_10 = arith.constant 1.280000e+02 : f32
    %14 = vector.broadcast %cst_10 : f32 to vector<16x1xf32>
    %15 = arith.divf %13, %14 : vector<16x1xf32>
    %16 = vector.broadcast %8 : vector<16x1xf32> to vector<16x128xf32>
    %17 = arith.subf %2, %16 : vector<16x128xf32>
    %cst_11 = arith.constant 9.99999974E-6 : f32
    %18 = vector.broadcast %cst_11 : f32 to vector<16x1xf32>
    %19 = arith.addf %15, %18 : vector<16x1xf32>
    %20 = math.rsqrt %19 : vector<16x1xf32>
    %21 = vector.broadcast %20 : vector<16x1xf32> to vector<16x128xf32>
    %22 = arith.mulf %17, %21 : vector<16x128xf32>
    %23 = vector.broadcast %3 : vector<16x1xf32> to vector<16x128xf32>
    %24 = arith.mulf %22, %23 : vector<16x128xf32>
    %25 = vector.broadcast %4 : vector<16x1xf32> to vector<16x128xf32>
    %26 = arith.addf %24, %25 : vector<16x128xf32>
    %c0_12 = arith.constant 0 : index
    %c0_13 = arith.constant 0 : index
    %27 = vector.load %arg6[%c0_12, %c0_13] : memref<8x16xf32, #tpu.memory_space<vmem>>, vector<8x16xf32>
    %c0_14 = arith.constant 0 : index
    %c0_15 = arith.constant 0 : index
    %28 = vector.load %arg5[%c0_14, %c0_15] : memref<16x128xf32, #tpu.memory_space<vmem>>, vector<16x128xf32>
    %cst_16 = arith.constant dense<0.000000e+00> : vector<8x128xf32>
    %29 = tpu.matmul %27, %28, %cst_16 {dimension_numbers = #tpu.dot_dimension_numbers<[1], [0], [0], [1], [0, 0, 1, 1], [], []>} : vector<8x16xf32>, vector<16x128xf32>, vector<8x128xf32> -> vector<8x128xf32>
    %c0_17 = arith.constant 0 : index
    %c0_18 = arith.constant 0 : index
    %30 = vector.load %arg7[%c0_17, %c0_18] : memref<8x1xf32, #tpu.memory_space<vmem>>, vector<8x1xf32>
    %c0_19 = arith.constant 0 : index
    %c0_20 = arith.constant 0 : index
    %31 = vector.load %arg8[%c0_19, %c0_20] : memref<8x1xf32, #tpu.memory_space<vmem>>, vector<8x1xf32>
    %cst_21 = arith.constant dense<0.000000e+00> : vector<8xf32>
    %32 = vector.multi_reduction <add>, %29, %cst_21 [1] : vector<8x128xf32> to vector<8xf32>
    %33 = vector.shape_cast %32 : vector<8xf32> to vector<8x1xf32>
    %cst_22 = arith.constant 1.280000e+02 : f32
    %34 = vector.broadcast %cst_22 : f32 to vector<8x1xf32>
    %35 = arith.divf %33, %34 : vector<8x1xf32>
    %36 = vector.broadcast %35 : vector<8x1xf32> to vector<8x128xf32>
    %37 = arith.subf %29, %36 : vector<8x128xf32>
    %38 = arith.mulf %37, %37 : vector<8x128xf32>
    %cst_23 = arith.constant dense<0.000000e+00> : vector<8xf32>
    %39 = vector.multi_reduction <add>, %38, %cst_23 [1] : vector<8x128xf32> to vector<8xf32>
    %40 = vector.shape_cast %39 : vector<8xf32> to vector<8x1xf32>
    %cst_24 = arith.constant 1.280000e+02 : f32
    %41 = vector.broadcast %cst_24 : f32 to vector<8x1xf32>
    %42 = arith.divf %40, %41 : vector<8x1xf32>
    %43 = vector.broadcast %35 : vector<8x1xf32> to vector<8x128xf32>
    %44 = arith.subf %29, %43 : vector<8x128xf32>
    %cst_25 = arith.constant 9.99999974E-6 : f32
    %45 = vector.broadcast %cst_25 : f32 to vector<8x1xf32>
    %46 = arith.addf %42, %45 : vector<8x1xf32>
    %47 = math.rsqrt %46 : vector<8x1xf32>
    %48 = vector.broadcast %47 : vector<8x1xf32> to vector<8x128xf32>
    %49 = arith.mulf %44, %48 : vector<8x128xf32>
    %50 = vector.broadcast %30 : vector<8x1xf32> to vector<8x128xf32>
    %51 = arith.mulf %49, %50 : vector<8x128xf32>
    %52 = vector.broadcast %31 : vector<8x1xf32> to vector<8x128xf32>
    %53 = arith.addf %51, %52 : vector<8x128xf32>
    %cst_26 = arith.constant 0.000000e+00 : f32
    %54 = vector.broadcast %cst_26 : f32 to vector<8x128xf32>
    %55 = tpu.concatenate %53, %54 in 0 : vector<8x128xf32>, vector<8x128xf32> -> vector<16x128xf32>
    %56 = arith.addf %26, %55 : vector<16x128xf32>
    %cst_27 = arith.constant 0.000000e+00 : f32
    %57 = vector.broadcast %cst_27 : f32 to vector<16x128xf32>
    %58 = arith.maximumf %56, %57 : vector<16x128xf32>
    %c0_28 = arith.constant 0 : index
    %c0_29 = arith.constant 0 : index
    %59 = vector.load %arg9[%c0_28, %c0_29] : memref<16x128xf32, #tpu.memory_space<vmem>>, vector<16x128xf32>
    tpu.vector_store %arg9[%c0_28, %c0_29], %58 {strides = array<i32>} : memref<16x128xf32, #tpu.memory_space<vmem>>, vector<16x128xf32>,
    return
  }
  func.func @transform_0(%arg0: i32) -> (i32, i32) {
    %c0_i32 = arith.constant 0 : i32
    %c0_i32_0 = arith.constant 0 : i32
    %c0_i32_1 = arith.constant 0 : i32
    return %c0_i32, %c0_i32_0 : i32, i32
  }
  func.func @transform_1(%arg0: i32) -> (i32, i32) {
    %c0_i32 = arith.constant 0 : i32
    %c0_i32_0 = arith.constant 0 : i32
    %c0_i32_1 = arith.constant 0 : i32
    return %c0_i32, %c0_i32_0 : i32, i32
  }
  func.func @transform_2(%arg0: i32) -> (i32, i32) {
    %c0_i32 = arith.constant 0 : i32
    %c0_i32_0 = arith.constant 0 : i32
    %c0_i32_1 = arith.constant 0 : i32
    return %c0_i32, %c0_i32_0 : i32, i32
  }
  func.func @transform_3(%arg0: i32) -> (i32, i32) {
    %c0_i32 = arith.constant 0 : i32
    %c0_i32_0 = arith.constant 0 : i32
    %c0_i32_1 = arith.constant 0 : i32
    return %c0_i32, %c0_i32_0 : i32, i32
  }
  func.func @transform_4(%arg0: i32) -> (i32, i32) {
    %c0_i32 = arith.constant 0 : i32
    %c0_i32_0 = arith.constant 0 : i32
    %c0_i32_1 = arith.constant 0 : i32
    return %c0_i32, %c0_i32_0 : i32, i32
  }
  func.func @transform_5(%arg0: i32) -> (i32, i32) {
    %c0_i32 = arith.constant 0 : i32
    %c0_i32_0 = arith.constant 0 : i32
    %c0_i32_1 = arith.constant 0 : i32
    return %c0_i32, %c0_i32_0 : i32, i32
  }
  func.func @transform_6(%arg0: i32) -> (i32, i32) {
    %c0_i32 = arith.constant 0 : i32
    %c0_i32_0 = arith.constant 0 : i32
    %c0_i32_1 = arith.constant 0 : i32
    return %c0_i32, %c0_i32_0 : i32, i32
  }
  func.func @transform_7(%arg0: i32) -> (i32, i32) {
    %c0_i32 = arith.constant 0 : i32
    %c0_i32_0 = arith.constant 0 : i32
    %c0_i32_1 = arith.constant 0 : i32
    return %c0_i32, %c0_i32_0 : i32, i32
  }
  func.func @transform_8(%arg0: i32) -> (i32, i32) {
    %c0_i32 = arith.constant 0 : i32
    %c0_i32_0 = arith.constant 0 : i32
    %c0_i32_1 = arith.constant 0 : i32
    return %c0_i32, %c0_i32_0 : i32, i32
  }
}

</mosaic_0001>

<llo_original>
// kernel: dpn_block_forward.2
$region0: #{dpn_block_forward.2}
  #allocation0 [shape = 'u32[]', space=smem, size = 0x4, offset = 0x4, fixed_abs, tag = 'smem constant byte address 0x4 - core index']
  #allocation1 [shape = 'u32[72,128]{1,0:T(1,128)}', space=vmem, size = 0x9000, scoped, tag = 'internal scratch']
  %s0 = inlined_call_operand.vmem [shape: f32[16,512], index: 0, kind: input, shape index: {}]
  %s1 = inlined_call_operand.vmem [shape: f32[16,1], index: 1, kind: input, shape index: {}]
  %s2 = inlined_call_operand.vmem [shape: f32[16,1], index: 2, kind: input, shape index: {}]
  %s3 = inlined_call_operand.vmem [shape: f32[16,16], index: 3, kind: input, shape index: {}]
  %s4 = inlined_call_operand.vmem [shape: f32[16,1], index: 4, kind: input, shape index: {}]
  %s5 = inlined_call_operand.vmem [shape: f32[16,1], index: 5, kind: input, shape index: {}]
  %s6 = inlined_call_operand.vmem [shape: f32[16,512], index: 6, kind: output, shape index: {}]
  %s7 = sld [smem:[#allocation0]]
  $region34: #{dpn_block_forward.2} parent=0
    _
  %s9 = ssub.s32 1, %s7
  %s10 = scalar_select 0, %s9, %s7
  // Predicated region
  $region2: #{dpn_block_forward.2} parent=0 // pred_check
    _
  $region3: #{dpn_block_forward.2} parent=0 // pred_check_branch
    %12 = sbr.rel (0) target = $region5
  $region4: #{dpn_block_forward.2} parent=0 // pred_region
    _
  $region5: #{dpn_block_forward.2} parent=0 // pred_fallthru
    _
  // Predicated region
  $region6: #{dpn_block_forward.2} parent=0 // pred_check
    _
  $region7: #{dpn_block_forward.2} parent=0 // pred_check_branch
    %14 = sbr.rel (0) target = $region9
  $region8: #{dpn_block_forward.2} parent=0 // pred_region
    _
  $region9: #{dpn_block_forward.2} parent=0 // pred_fallthru
    _
  // Predicated region
  $region10: #{dpn_block_forward.2} parent=0 // pred_check
    _
  $region11: #{dpn_block_forward.2} parent=0 // pred_check_branch
    %16 = sbr.rel (0) target = $region13
  $region12: #{dpn_block_forward.2} parent=0 // pred_region
    _
  $region13: #{dpn_block_forward.2} parent=0 // pred_fallthru
    _
  // Predicated region
  $region14: #{dpn_block_forward.2} parent=0 // pred_check
    _
  $region15: #{dpn_block_forward.2} parent=0 // pred_check_branch
    %18 = sbr.rel (0) target = $region17
  $region16: #{dpn_block_forward.2} parent=0 // pred_region
    _
  $region17: #{dpn_block_forward.2} parent=0 // pred_fallthru
    _
  // Predicated region
  $region18: #{dpn_block_forward.2} parent=0 // pred_check
    _
  $region19: #{dpn_block_forward.2} parent=0 // pred_check_branch
    %20 = sbr.rel (0) target = $region21
  $region20: #{dpn_block_forward.2} parent=0 // pred_region
    _
  $region21: #{dpn_block_forward.2} parent=0 // pred_fallthru
    _
  // Predicated region
  $region22: #{dpn_block_forward.2} parent=0 // pred_check
    _
  $region23: #{dpn_block_forward.2} parent=0 // pred_check_branch
    %22 = sbr.rel (0) target = $region25
  $region24: #{dpn_block_forward.2} parent=0 // pred_region
    _
  $region25: #{dpn_block_forward.2} parent=0 // pred_fallthru
    _
  %v23 = vld [vmem:[%s0] sm:$0xff]
  %v24 = vld [vmem:[%s0 + $0x8] sm:$0xff]
  %v25 = vld [vmem:[%s0 + $0x10] sm:$0xff]
  %v26 = vld [vmem:[%s0 + $0x18] sm:$0xff]
  %v27 = vld [vmem:[%s0 + $0x20] sm:$0xff]
  %v28 = vld [vmem:[%s0 + $0x28] sm:$0xff]
  %v29 = vld [vmem:[%s0 + $0x30] sm:$0xff]
  %v30 = vld [vmem:[%s0 + $0x38] sm:$0xff]
  %v31 = vld [vmem:[%s1] sm:$0xff]
  %v32 = vld [vmem:[%s1 + $0x8] sm:$0xff]
  %v33 = vld [vmem:[%s2] sm:$0xff]
  %v34 = vld [vmem:[%s2 + $0x8] sm:$0xff]
  %v35 = vadd.f32 %v23, %v24
  %v36 = vadd.f32 %v35, %v25
  %v37 = vadd.f32 %v36, %v26
  %38 = vadd.xlane.f32.xlu0 %v37
  %v39 = vpop.xlane.xlu0 %38
  %v40 = vadd.f32 %v27, %v28
  %v41 = vadd.f32 %v40, %v29
  %v42 = vadd.f32 %v41, %v30
  %43 = vadd.xlane.f32.xlu0 %v42
  %v44 = vpop.xlane.xlu0 %43
  %v45 = vrcp.pop 512.0
  %v46 = vmul.f32 512.0, %v45
  %v47 = vsub.f32 1.0, %v46
  %v48 = vmul.f32 %v45, %v47
  %v49 = vadd.f32 %v45, %v48
  %vm50 = vweird.f32 %v45
  %v51 = vsel %vm50, %v45, %v49
  %v52 = vmul.f32 %v39, %v51
  %v53 = vmul.f32 %v44, %v51
  %v54 = vsub.f32 %v23, %v52
  %v55 = vsub.f32 %v24, %v52
  %v56 = vsub.f32 %v25, %v52
  %v57 = vsub.f32 %v26, %v52
  %v58 = vsub.f32 %v27, %v53
  %v59 = vsub.f32 %v28, %v53
  %v60 = vsub.f32 %v29, %v53
  %v61 = vsub.f32 %v30, %v53
  %v62 = vmul.f32 %v54, %v54
  %v63 = vmul.f32 %v55, %v55
  %v64 = vmul.f32 %v56, %v56
  %v65 = vmul.f32 %v57, %v57
  %v66 = vmul.f32 %v58, %v58
  %v67 = vmul.f32 %v59, %v59
  %v68 = vmul.f32 %v60, %v60
  %v69 = vmul.f32 %v61, %v61
  %v70 = vadd.f32 %v62, %v63
  %v71 = vadd.f32 %v70, %v64
  %v72 = vadd.f32 %v71, %v65
  %73 = vadd.xlane.f32.xlu0 %v72
  %v74 = vpop.xlane.xlu0 %73
  %v75 = vadd.f32 %v66, %v67
  %v76 = vadd.f32 %v75, %v68
  %v77 = vadd.f32 %v76, %v69
  %78 = vadd.xlane.f32.xlu0 %v77
  %v79 = vpop.xlane.xlu0 %78
  %v80 = vmul.f32 %v74, %v51
  %v81 = vmul.f32 %v79, %v51
  %v82 = vadd.f32 %v80, 0.001
  %v83 = vadd.f32 %v81, 0.001
  %v84 = vrsqrt.pop %v82
  %v85 = vmul.f32 %v84, %v82
  %v86 = vmul.f32 %v85, %v84
  %v87 = vmul.f32 0.5, %v86
  %v88 = vsub.f32 1.5, %v87
  %v89 = vmul.f32 %v84, %v88
  %vm90 = vweird.f32 %v82
  %vm91 = vweird.f32 %v84
  %vm92 = vmor %vm90, %vm91
  %v93 = vsel %vm92, %v84, %v89
  %v94 = vrsqrt.pop %v83
  %v95 = vmul.f32 %v94, %v83
  %v96 = vmul.f32 %v95, %v94
  %v97 = vmul.f32 0.5, %v96
  %v98 = vsub.f32 1.5, %v97
  %v99 = vmul.f32 %v94, %v98
  %vm100 = vweird.f32 %v83
  %vm101 = vweird.f32 %v94
  %vm102 = vmor %vm100, %vm101
  %v103 = vsel %vm102, %v94, %v99
  %v104 = vmul.f32 %v54, %v93
  %v105 = vmul.f32 %v55, %v93
  %v106 = vmul.f32 %v56, %v93
  %v107 = vmul.f32 %v57, %v93
  %v108 = vmul.f32 %v58, %v103
  %v109 = vmul.f32 %v59, %v103
  %v110 = vmul.f32 %v60, %v103
  %v111 = vmul.f32 %v61, %v103
  %113 = vset.pattern.permute.xlu0 0
  %114 = vperm.xlu0 %113, %v31
  %v115 = vpop.permute.xlu0 %114
  %118 = vset.pattern.permute.xlu0 0
  %119 = vperm.xlu0 %118, %v32
  %v120 = vpop.permute.xlu0 %119
  %v122 = vmul.f32 %v104, %v115
  %v123 = vmul.f32 %v105, %v115
  %v124 = vmul.f32 %v106, %v115
  %v125 = vmul.f32 %v107, %v115
  %v126 = vmul.f32 %v108, %v120
  %v127 = vmul.f32 %v109, %v120
  %v128 = vmul.f32 %v110, %v120
  %v129 = vmul.f32 %v111, %v120
  %131 = vset.pattern.permute.xlu0 0
  %132 = vperm.xlu0 %131, %v33
  %v133 = vpop.permute.xlu0 %132
  %136 = vset.pattern.permute.xlu0 0
  %137 = vperm.xlu0 %136, %v34
  %v138 = vpop.permute.xlu0 %137
  %v140 = vadd.f32 %v122, %v133
  %v141 = vadd.f32 %v123, %v133
  %v142 = vadd.f32 %v124, %v133
  %v143 = vadd.f32 %v125, %v133
  %v144 = vadd.f32 %v126, %v138
  %v145 = vadd.f32 %v127, %v138
  %v146 = vadd.f32 %v128, %v138
  %v147 = vadd.f32 %v129, %v138
  %v148 = vmax.f32 %v140, 0.0
  %v149 = vmax.f32 %v141, 0.0
  %v150 = vmax.f32 %v142, 0.0
  %v151 = vmax.f32 %v143, 0.0
  %v152 = vmax.f32 %v144, 0.0
  %v153 = vmax.f32 %v145, 0.0
  %v154 = vmax.f32 %v146, 0.0
  %v155 = vmax.f32 %v147, 0.0
  %v156 = vld [vmem:[%s3] sm:$0xff]
  %v157 = vld [vmem:[%s3 + $0x8] sm:$0xff]
  %vm158 = vcmask 130048
  %v160 = vsel %vm158, %v156, 0
  %v163 = vsel %vm158, %v157, 0
  %165 = vmatpush.msra.mxu0 0.0
  %166 = vmatpush.msra.mxu0 0.0
  %167 = vmatpush.msra.mxu0 0.0
  %168 = vmatpush.msra.mxu0 0.0
  %169 = vmatpush.msra.mxu0 0.0
  %170 = vmatpush.msra.mxu0 0.0
  %171 = vmatpush.msra.mxu0 0.0
  %172 = vmatpush.msra.mxu0 0.0
  %173 = vmatpush.msra.mxu0 0.0
  %174 = vmatpush.msra.mxu0 0.0
  %175 = vmatpush.msra.mxu0 0.0
  %176 = vmatpush.msra.mxu0 0.0
  %177 = vmatpush.msra.mxu0 0.0
  %178 = vmatpush.msra.mxu0 0.0
  %179 = vmatpush.msra.mxu0 %v152
  %180 = vmatpush.msra.mxu0 %v148
  %181 = vmatmul.f32.gmra.mxu0 %v160
  %v182 = vpop.f32.mrf.mxu0
  %v183 = vadd.f32 0.0, %v182
  %184 = vmatmul.f32.gmra.mxu0 %v163
  %v185 = vpop.f32.mrf.mxu0
  %v186 = vadd.f32 0.0, %v185
  %187 = vdwg.mxu0
  %188 = vmatpush.msra.mxu0 0.0
  %189 = vmatpush.msra.mxu0 0.0
  %190 = vmatpush.msra.mxu0 0.0
  %191 = vmatpush.msra.mxu0 0.0
  %192 = vmatpush.msra.mxu0 0.0
  %193 = vmatpush.msra.mxu0 0.0
  %194 = vmatpush.msra.mxu0 0.0
  %195 = vmatpush.msra.mxu0 0.0
  %196 = vmatpush.msra.mxu0 0.0
  %197 = vmatpush.msra.mxu0 0.0
  %198 = vmatpush.msra.mxu0 0.0
  %199 = vmatpush.msra.mxu0 0.0
  %200 = vmatpush.msra.mxu0 0.0
  %201 = vmatpush.msra.mxu0 0.0
  %202 = vmatpush.msra.mxu0 %v153
  %203 = vmatpush.msra.mxu0 %v149
  %204 = vmatmul.f32.gmra.mxu0 %v160
  %v205 = vpop.f32.mrf.mxu0
  %v206 = vadd.f32 0.0, %v205
  %207 = vmatmul.f32.gmra.mxu0 %v163
  %v208 = vpop.f32.mrf.mxu0
  %v209 = vadd.f32 0.0, %v208
  %210 = vdwg.mxu0
  %211 = vmatpush.msra.mxu0 0.0
  %212 = vmatpush.msra.mxu0 0.0
  %213 = vmatpush.msra.mxu0 0.0
  %214 = vmatpush.msra.mxu0 0.0
  %215 = vmatpush.msra.mxu0 0.0
  %216 = vmatpush.msra.mxu0 0.0
  %217 = vmatpush.msra.mxu0 0.0
  %218 = vmatpush.msra.mxu0 0.0
  %219 = vmatpush.msra.mxu0 0.0
  %220 = vmatpush.msra.mxu0 0.0
  %221 = vmatpush.msra.mxu0 0.0
  %222 = vmatpush.msra.mxu0 0.0
  %223 = vmatpush.msra.mxu0 0.0
  %224 = vmatpush.msra.mxu0 0.0
  %225 = vmatpush.msra.mxu0 %v154
  %226 = vmatpush.msra.mxu0 %v150
  %227 = vmatmul.f32.gmra.mxu0 %v160
  %v228 = vpop.f32.mrf.mxu0
  %v229 = vadd.f32 0.0, %v228
  %230 = vmatmul.f32.gmra.mxu0 %v163
  %v231 = vpop.f32.mrf.mxu0
  %v232 = vadd.f32 0.0, %v231
  %233 = vdwg.mxu0
  %234 = vmatpush.msra.mxu0 0.0
  %235 = vmatpush.msra.mxu0 0.0
  %236 = vmatpush.msra.mxu0 0.0
  %237 = vmatpush.msra.mxu0 0.0
  %238 = vmatpush.msra.mxu0 0.0
  %239 = vmatpush.msra.mxu0 0.0
  %240 = vmatpush.msra.mxu0 0.0
  %241 = vmatpush.msra.mxu0 0.0
  %242 = vmatpush.msra.mxu0 0.0
  %243 = vmatpush.msra.mxu0 0.0
  %244 = vmatpush.msra.mxu0 0.0
  %245 = vmatpush.msra.mxu0 0.0
  %246 = vmatpush.msra.mxu0 0.0
  %247 = vmatpush.msra.mxu0 0.0
  %248 = vmatpush.msra.mxu0 %v155
  %249 = vmatpush.msra.mxu0 %v151
  %250 = vmatmul.f32.gmra.mxu0 %v160
  %v251 = vpop.f32.mrf.mxu0
  %v252 = vadd.f32 0.0, %v251
  %253 = vmatmul.f32.gmra.mxu0 %v163
  %v254 = vpop.f32.mrf.mxu0
  %v255 = vadd.f32 0.0, %v254
  %256 = vdwg.mxu0
  %v257 = vld [vmem:[%s4] sm:$0xff]
  %v258 = vld [vmem:[%s4 + $0x8] sm:$0xff]
  %v259 = vld [vmem:[%s5] sm:$0xff]
  %v260 = vld [vmem:[%s5 + $0x8] sm:$0xff]
  %v261 = vadd.f32 %v183, %v206
  %v262 = vadd.f32 %v261, %v229
  %v263 = vadd.f32 %v262, %v252
  %264 = vadd.xlane.f32.xlu0 %v263
  %v265 = vpop.xlane.xlu0 %264
  %v266 = vadd.f32 %v186, %v209
  %v267 = vadd.f32 %v266, %v232
  %v268 = vadd.f32 %v267, %v255
  %269 = vadd.xlane.f32.xlu0 %v268
  %v270 = vpop.xlane.xlu0 %269
  %v271 = vmul.f32 %v265, %v51
  %v272 = vmul.f32 %v270, %v51
  %v273 = vsub.f32 %v183, %v271
  %v274 = vsub.f32 %v206, %v271
  %v275 = vsub.f32 %v229, %v271
  %v276 = vsub.f32 %v252, %v271
  %v277 = vsub.f32 %v186, %v272
  %v278 = vsub.f32 %v209, %v272
  %v279 = vsub.f32 %v232, %v272
  %v280 = vsub.f32 %v255, %v272
  %v281 = vmul.f32 %v273, %v273
  %v282 = vmul.f32 %v274, %v274
  %v283 = vmul.f32 %v275, %v275
  %v284 = vmul.f32 %v276, %v276
  %v285 = vmul.f32 %v277, %v277
  %v286 = vmul.f32 %v278, %v278
  %v287 = vmul.f32 %v279, %v279
  %v288 = vmul.f32 %v280, %v280
  %v289 = vadd.f32 %v281, %v282
  %v290 = vadd.f32 %v289, %v283
  %v291 = vadd.f32 %v290, %v284
  %292 = vadd.xlane.f32.xlu0 %v291
  %v293 = vpop.xlane.xlu0 %292
  %v294 = vadd.f32 %v285, %v286
  %v295 = vadd.f32 %v294, %v287
  %v296 = vadd.f32 %v295, %v288
  %297 = vadd.xlane.f32.xlu0 %v296
  %v298 = vpop.xlane.xlu0 %297
  %v299 = vmul.f32 %v293, %v51
  %v300 = vmul.f32 %v298, %v51
  %v301 = vadd.f32 %v299, 0.001
  %v302 = vadd.f32 %v300, 0.001
  %v303 = vrsqrt.pop %v301
  %v304 = vmul.f32 %v303, %v301
  %v305 = vmul.f32 %v304, %v303
  %v306 = vmul.f32 0.5, %v305
  %v307 = vsub.f32 1.5, %v306
  %v308 = vmul.f32 %v303, %v307
  %vm309 = vweird.f32 %v301
  %vm310 = vweird.f32 %v303
  %vm311 = vmor %vm309, %vm310
  %v312 = vsel %vm311, %v303, %v308
  %v313 = vrsqrt.pop %v302
  %v314 = vmul.f32 %v313, %v302
  %v315 = vmul.f32 %v314, %v313
  %v316 = vmul.f32 0.5, %v315
  %v317 = vsub.f32 1.5, %v316
  %v318 = vmul.f32 %v313, %v317
  %vm319 = vweird.f32 %v302
  %vm320 = vweird.f32 %v313
  %vm321 = vmor %vm319, %vm320
  %v322 = vsel %vm321, %v313, %v318
  %v323 = vmul.f32 %v273, %v312
  %v324 = vmul.f32 %v274, %v312
  %v325 = vmul.f32 %v275, %v312
  %v326 = vmul.f32 %v276, %v312
  %v327 = vmul.f32 %v277, %v322
  %v328 = vmul.f32 %v278, %v322
  %v329 = vmul.f32 %v279, %v322
  %v330 = vmul.f32 %v280, %v322
  %332 = vset.pattern.permute.xlu0 0
  %333 = vperm.xlu0 %332, %v257
  %v334 = vpop.permute.xlu0 %333
  %337 = vset.pattern.permute.xlu0 0
  %338 = vperm.xlu0 %337, %v258
  %v339 = vpop.permute.xlu0 %338
  %v341 = vmul.f32 %v323, %v334
  %v342 = vmul.f32 %v324, %v334
  %v343 = vmul.f32 %v325, %v334
  %v344 = vmul.f32 %v326, %v334
  %v345 = vmul.f32 %v327, %v339
  %v346 = vmul.f32 %v328, %v339
  %v347 = vmul.f32 %v329, %v339
  %v348 = vmul.f32 %v330, %v339
  %350 = vset.pattern.permute.xlu0 0
  %351 = vperm.xlu0 %350, %v259
  %v352 = vpop.permute.xlu0 %351
  %355 = vset.pattern.permute.xlu0 0
  %356 = vperm.xlu0 %355, %v260
  %v357 = vpop.permute.xlu0 %356
  %v359 = vadd.f32 %v341, %v352
  %v360 = vadd.f32 %v342, %v352
  %v361 = vadd.f32 %v343, %v352
  %v362 = vadd.f32 %v344, %v352
  %v363 = vadd.f32 %v345, %v357
  %v364 = vadd.f32 %v346, %v357
  %v365 = vadd.f32 %v347, %v357
  %v366 = vadd.f32 %v348, %v357
  %v367 = vmax.f32 %v359, 0.0
  %v368 = vmax.f32 %v360, 0.0
  %v369 = vmax.f32 %v361, 0.0
  %v370 = vmax.f32 %v362, 0.0
  %v371 = vmax.f32 %v363, 0.0
  %v372 = vmax.f32 %v364, 0.0
  %v373 = vmax.f32 %v365, 0.0
  %v374 = vmax.f32 %v366, 0.0
  %375 = vst [vmem:[%s6] sm:$0xff] %v367
  %376 = vst [vmem:[%s6 + $0x8] sm:$0xff] %v368
  %377 = vst [vmem:[%s6 + $0x10] sm:$0xff] %v369
  %378 = vst [vmem:[%s6 + $0x18] sm:$0xff] %v370
  %379 = vst [vmem:[%s6 + $0x20] sm:$0xff] %v371
  %380 = vst [vmem:[%s6 + $0x28] sm:$0xff] %v372
  %381 = vst [vmem:[%s6 + $0x30] sm:$0xff] %v373
  %382 = vst [vmem:[%s6 + $0x38] sm:$0xff] %v374
  // Predicated region
  $region26: #{dpn_block_forward.2} parent=0 // pred_check
    _
  $region27: #{dpn_block_forward.2} parent=0 // pred_check_branch
    %384 = sbr.rel (0) target = $region29
  $region28: #{dpn_block_forward.2} parent=0 // pred_region
    _
  $region29: #{dpn_block_forward.2} parent=0 // pred_fallthru
    _
  // Predicated region
  $region30: #{dpn_block_forward.2} parent=0 // pred_check
    _
  $region31: #{dpn_block_forward.2} parent=0 // pred_check_branch
    %386 = sbr.rel (0) target = $region33
  $region32: #{dpn_block_forward.2} parent=0 // pred_region
    _
  $region33: #{dpn_block_forward.2} parent=0 // pred_fallthru
    _

// kernel: dpn_block_forward.3
$region0: #{dpn_block_forward.3}
  #allocation0 [shape = 'u32[]', space=smem, size = 0x4, offset = 0x4, fixed_abs, tag = 'smem constant byte address 0x4 - core index']
  #allocation1 [shape = 'u32[72,128]{1,0:T(1,128)}', space=vmem, size = 0x9000, scoped, tag = 'internal scratch']
  %s0 = inlined_call_operand.vmem [shape: f32[144,128], index: 0, kind: input, shape index: {}]
  %s1 = inlined_call_operand.vmem [shape: f32[16,144], index: 1, kind: input, shape index: {}]
  %s2 = inlined_call_operand.vmem [shape: f32[16,1], index: 2, kind: input, shape index: {}]
  %s3 = inlined_call_operand.vmem [shape: f32[16,1], index: 3, kind: input, shape index: {}]
  %s4 = inlined_call_operand.vmem [shape: f32[16,128], index: 4, kind: input, shape index: {}]
  %s5 = inlined_call_operand.vmem [shape: f32[8,16], index: 5, kind: input, shape index: {}]
  %s6 = inlined_call_operand.vmem [shape: f32[8,1], index: 6, kind: input, shape index: {}]
  %s7 = inlined_call_operand.vmem [shape: f32[8,1], index: 7, kind: input, shape index: {}]
  %s8 = inlined_call_operand.vmem [shape: f32[16,128], index: 8, kind: output, shape index: {}]
  %s9 = sld [smem:[#allocation0]]
  $region42: #{dpn_block_forward.3} parent=0
    _
  %s11 = ssub.s32 1, %s9
  %s12 = scalar_select 0, %s11, %s9
  // Predicated region
  $region2: #{dpn_block_forward.3} parent=0 // pred_check
    _
  $region3: #{dpn_block_forward.3} parent=0 // pred_check_branch
    %14 = sbr.rel (0) target = $region5
  $region4: #{dpn_block_forward.3} parent=0 // pred_region
    _
  $region5: #{dpn_block_forward.3} parent=0 // pred_fallthru
    _
  // Predicated region
  $region6: #{dpn_block_forward.3} parent=0 // pred_check
    _
  $region7: #{dpn_block_forward.3} parent=0 // pred_check_branch
    %16 = sbr.rel (0) target = $region9
  $region8: #{dpn_block_forward.3} parent=0 // pred_region
    _
  $region9: #{dpn_block_forward.3} parent=0 // pred_fallthru
    _
  // Predicated region
  $region10: #{dpn_block_forward.3} parent=0 // pred_check
    _
  $region11: #{dpn_block_forward.3} parent=0 // pred_check_branch
    %18 = sbr.rel (0) target = $region13
  $region12: #{dpn_block_forward.3} parent=0 // pred_region
    _
  $region13: #{dpn_block_forward.3} parent=0 // pred_fallthru
    _
  // Predicated region
  $region14: #{dpn_block_forward.3} parent=0 // pred_check
    _
  $region15: #{dpn_block_forward.3} parent=0 // pred_check_branch
    %20 = sbr.rel (0) target = $region17
  $region16: #{dpn_block_forward.3} parent=0 // pred_region
    _
  $region17: #{dpn_block_forward.3} parent=0 // pred_fallthru
    _
  // Predicated region
  $region18: #{dpn_block_forward.3} parent=0 // pred_check
    _
  $region19: #{dpn_block_forward.3} parent=0 // pred_check_branch
    %22 = sbr.rel (0) target = $region21
  $region20: #{dpn_block_forward.3} parent=0 // pred_region
    _
  $region21: #{dpn_block_forward.3} parent=0 // pred_fallthru
    _
  // Predicated region
  $region22: #{dpn_block_forward.3} parent=0 // pred_check
    _
  $region23: #{dpn_block_forward.3} parent=0 // pred_check_branch
    %24 = sbr.rel (0) target = $region25
  $region24: #{dpn_block_forward.3} parent=0 // pred_region
    _
  $region25: #{dpn_block_forward.3} parent=0 // pred_fallthru
    _
  // Predicated region
  $region26: #{dpn_block_forward.3} parent=0 // pred_check
    _
  $region27: #{dpn_block_forward.3} parent=0 // pred_check_branch
    %26 = sbr.rel (0) target = $region29
  $region28: #{dpn_block_forward.3} parent=0 // pred_region
    _
  $region29: #{dpn_block_forward.3} parent=0 // pred_fallthru
    _
  // Predicated region
  $region30: #{dpn_block_forward.3} parent=0 // pred_check
    _
  $region31: #{dpn_block_forward.3} parent=0 // pred_check_branch
    %28 = sbr.rel (0) target = $region33
  $region32: #{dpn_block_forward.3} parent=0 // pred_region
    _
  $region33: #{dpn_block_forward.3} parent=0 // pred_fallthru
    _
  %v29 = vld [vmem:[%s1] sm:$0xff]
  %v30 = vld [vmem:[%s1 + $0x8] sm:$0xff]
  %v31 = vld [vmem:[%s1 + $0x10] sm:$0xff]
  %v32 = vld [vmem:[%s1 + $0x18] sm:$0xff]
  %v33 = vld [vmem:[%s0] sm:$0xff]
  %v34 = vld [vmem:[%s0 + $0x8] sm:$0xff]
  %v35 = vld [vmem:[%s0 + $0x10] sm:$0xff]
  %v36 = vld [vmem:[%s0 + $0x18] sm:$0xff]
  %v37 = vld [vmem:[%s0 + $0x20] sm:$0xff]
  %v38 = vld [vmem:[%s0 + $0x28] sm:$0xff]
  %v39 = vld [vmem:[%s0 + $0x30] sm:$0xff]
  %v40 = vld [vmem:[%s0 + $0x38] sm:$0xff]
  %v41 = vld [vmem:[%s0 + $0x40] sm:$0xff]
  %v42 = vld [vmem:[%s0 + $0x48] sm:$0xff]
  %v43 = vld [vmem:[%s0 + $0x50] sm:$0xff]
  %v44 = vld [vmem:[%s0 + $0x58] sm:$0xff]
  %v45 = vld [vmem:[%s0 + $0x60] sm:$0xff]
  %v46 = vld [vmem:[%s0 + $0x68] sm:$0xff]
  %v47 = vld [vmem:[%s0 + $0x70] sm:$0xff]
  %v48 = vld [vmem:[%s0 + $0x78] sm:$0xff]
  %v49 = vld [vmem:[%s0 + $0x80] sm:$0xff]
  %v50 = vld [vmem:[%s0 + $0x88] sm:$0xff]
  %vm51 = vcmask 130048
  %v53 = vsel %vm51, %v30, 0
  %v56 = vsel %vm51, %v32, 0
  %58 = vmatpush.msra.mxu0 %v48
  %59 = vmatpush.msra.mxu0 %v47
  %60 = vmatpush.msra.mxu0 %v46
  %61 = vmatpush.msra.mxu0 %v45
  %62 = vmatpush.msra.mxu0 %v44
  %63 = vmatpush.msra.mxu0 %v43
  %64 = vmatpush.msra.mxu0 %v42
  %65 = vmatpush.msra.mxu0 %v41
  %66 = vmatpush.msra.mxu0 %v40
  %67 = vmatpush.msra.mxu0 %v39
  %68 = vmatpush.msra.mxu0 %v38
  %69 = vmatpush.msra.mxu0 %v37
  %70 = vmatpush.msra.mxu0 %v36
  %71 = vmatpush.msra.mxu0 %v35
  %72 = vmatpush.msra.mxu0 %v34
  %73 = vmatpush.msra.mxu0 %v33
  %74 = vmatmul.f32.gmra.mxu0 %v29
  %v75 = vpop.f32.mrf.mxu0
  %v76 = vadd.f32 0.0, %v75
  %77 = vmatmul.f32.gmra.mxu0 %v31
  %v78 = vpop.f32.mrf.mxu0
  %v79 = vadd.f32 0.0, %v78
  %80 = vdwg.mxu0
  %81 = vmatpush.msra.mxu0 0.0
  %82 = vmatpush.msra.mxu0 0.0
  %83 = vmatpush.msra.mxu0 0.0
  %84 = vmatpush.msra.mxu0 0.0
  %85 = vmatpush.msra.mxu0 0.0
  %86 = vmatpush.msra.mxu0 0.0
  %87 = vmatpush.msra.mxu0 0.0
  %88 = vmatpush.msra.mxu0 0.0
  %89 = vmatpush.msra.mxu0 0.0
  %90 = vmatpush.msra.mxu0 0.0
  %91 = vmatpush.msra.mxu0 0.0
  %92 = vmatpush.msra.mxu0 0.0
  %93 = vmatpush.msra.mxu0 0.0
  %94 = vmatpush.msra.mxu0 0.0
  %95 = vmatpush.msra.mxu0 %v50
  %96 = vmatpush.msra.mxu0 %v49
  %97 = vmatmul.f32.gmra.mxu0 %v53
  %v98 = vpop.f32.mrf.mxu0
  %v99 = vadd.f32 %v76, %v98
  %100 = vmatmul.f32.gmra.mxu0 %v56
  %v101 = vpop.f32.mrf.mxu0
  %v102 = vadd.f32 %v79, %v101
  %103 = vdwg.mxu0
  %v104 = vld [vmem:[%s2] sm:$0xff]
  %v105 = vld [vmem:[%s2 + $0x8] sm:$0xff]
  %v106 = vld [vmem:[%s3] sm:$0xff]
  %v107 = vld [vmem:[%s3 + $0x8] sm:$0xff]
  %108 = vadd.xlane.f32.xlu0 %v99
  %v109 = vpop.xlane.xlu0 %108
  %110 = vadd.xlane.f32.xlu0 %v102
  %v111 = vpop.xlane.xlu0 %110
  %v112 = vrcp.pop 128.0
  %v113 = vmul.f32 128.0, %v112
  %v114 = vsub.f32 1.0, %v113
  %v115 = vmul.f32 %v112, %v114
  %v116 = vadd.f32 %v112, %v115
  %vm117 = vweird.f32 %v112
  %v118 = vsel %vm117, %v112, %v116
  %v119 = vmul.f32 %v109, %v118
  %v120 = vmul.f32 %v111, %v118
  %v121 = vsub.f32 %v99, %v119
  %v122 = vsub.f32 %v102, %v120
  %v123 = vmul.f32 %v121, %v121
  %v124 = vmul.f32 %v122, %v122
  %125 = vadd.xlane.f32.xlu0 %v123
  %v126 = vpop.xlane.xlu0 %125
  %127 = vadd.xlane.f32.xlu0 %v124
  %v128 = vpop.xlane.xlu0 %127
  %v129 = vmul.f32 %v126, %v118
  %v130 = vmul.f32 %v128, %v118
  %v131 = vadd.f32 %v129, 1e-05
  %v132 = vadd.f32 %v130, 1e-05
  %v133 = vrsqrt.pop %v131
  %v134 = vmul.f32 %v133, %v131
  %v135 = vmul.f32 %v134, %v133
  %v136 = vmul.f32 0.5, %v135
  %v137 = vsub.f32 1.5, %v136
  %v138 = vmul.f32 %v133, %v137
  %vm139 = vweird.f32 %v131
  %vm140 = vweird.f32 %v133
  %vm141 = vmor %vm139, %vm140
  %v142 = vsel %vm141, %v133, %v138
  %v143 = vrsqrt.pop %v132
  %v144 = vmul.f32 %v143, %v132
  %v145 = vmul.f32 %v144, %v143
  %v146 = vmul.f32 0.5, %v145
  %v147 = vsub.f32 1.5, %v146
  %v148 = vmul.f32 %v143, %v147
  %vm149 = vweird.f32 %v132
  %vm150 = vweird.f32 %v143
  %vm151 = vmor %vm149, %vm150
  %v152 = vsel %vm151, %v143, %v148
  %v153 = vmul.f32 %v121, %v142
  %v154 = vmul.f32 %v122, %v152
  %156 = vset.pattern.permute.xlu0 0
  %157 = vperm.xlu0 %156, %v104
  %v158 = vpop.permute.xlu0 %157
  %161 = vset.pattern.permute.xlu0 0
  %162 = vperm.xlu0 %161, %v105
  %v163 = vpop.permute.xlu0 %162
  %v165 = vmul.f32 %v153, %v158
  %v166 = vmul.f32 %v154, %v163
  %168 = vset.pattern.permute.xlu0 0
  %169 = vperm.xlu0 %168, %v106
  %v170 = vpop.permute.xlu0 %169
  %173 = vset.pattern.permute.xlu0 0
  %174 = vperm.xlu0 %173, %v107
  %v175 = vpop.permute.xlu0 %174
  %v177 = vadd.f32 %v165, %v170
  %v178 = vadd.f32 %v166, %v175
  %v179 = vld [vmem:[%s5] sm:$0xff]
  %v180 = vld [vmem:[%s4] sm:$0xff]
  %v181 = vld [vmem:[%s4 + $0x8] sm:$0xff]
  %v183 = vsel %vm51, %v179, 0
  %185 = vmatpush.msra.mxu0 0.0
  %186 = vmatpush.msra.mxu0 0.0
  %187 = vmatpush.msra.mxu0 0.0
  %188 = vmatpush.msra.mxu0 0.0
  %189 = vmatpush.msra.mxu0 0.0
  %190 = vmatpush.msra.mxu0 0.0
  %191 = vmatpush.msra.mxu0 0.0
  %192 = vmatpush.msra.mxu0 0.0
  %193 = vmatpush.msra.mxu0 0.0
  %194 = vmatpush.msra.mxu0 0.0
  %195 = vmatpush.msra.mxu0 0.0
  %196 = vmatpush.msra.mxu0 0.0
  %197 = vmatpush.msra.mxu0 0.0
  %198 = vmatpush.msra.mxu0 0.0
  %199 = vmatpush.msra.mxu0 %v181
  %200 = vmatpush.msra.mxu0 %v180
  %201 = vmatmul.f32.gmra.mxu0 %v183
  %v202 = vpop.f32.mrf.mxu0
  %v203 = vadd.f32 0.0, %v202
  %204 = vdwg.mxu0
  %v205 = vld [vmem:[%s6] sm:$0xff]
  %v206 = vld [vmem:[%s7] sm:$0xff]
  %207 = vadd.xlane.f32.xlu0 %v203
  %v208 = vpop.xlane.xlu0 %207
  %v209 = vmul.f32 %v208, %v118
  %v210 = vsub.f32 %v203, %v209
  %v211 = vmul.f32 %v210, %v210
  %212 = vadd.xlane.f32.xlu0 %v211
  %v213 = vpop.xlane.xlu0 %212
  %v214 = vmul.f32 %v213, %v118
  %v215 = vadd.f32 %v214, 1e-05
  %v216 = vrsqrt.pop %v215
  %v217 = vmul.f32 %v216, %v215
  %v218 = vmul.f32 %v217, %v216
  %v219 = vmul.f32 0.5, %v218
  %v220 = vsub.f32 1.5, %v219
  %v221 = vmul.f32 %v216, %v220
  %vm222 = vweird.f32 %v215
  %vm223 = vweird.f32 %v216
  %vm224 = vmor %vm222, %vm223
  %v225 = vsel %vm224, %v216, %v221
  %v226 = vmul.f32 %v210, %v225
  %228 = vset.pattern.permute.xlu0 0
  %229 = vperm.xlu0 %228, %v205
  %v230 = vpop.permute.xlu0 %229
  %v232 = vmul.f32 %v226, %v230
  %234 = vset.pattern.permute.xlu0 0
  %235 = vperm.xlu0 %234, %v206
  %v236 = vpop.permute.xlu0 %235
  %v238 = vadd.f32 %v232, %v236
  %v239 = vadd.f32 %v177, %v238
  %v240 = vadd.f32 %v178, 0.0
  %v241 = vmax.f32 %v239, 0.0
  %v242 = vmax.f32 %v240, 0.0
  %243 = vst [vmem:[%s8] sm:$0xff] %v241
  %244 = vst [vmem:[%s8 + $0x8] sm:$0xff] %v242
  // Predicated region
  $region34: #{dpn_block_forward.3} parent=0 // pred_check
    _
  $region35: #{dpn_block_forward.3} parent=0 // pred_check_branch
    %246 = sbr.rel (0) target = $region37
  $region36: #{dpn_block_forward.3} parent=0 // pred_region
    _
  $region37: #{dpn_block_forward.3} parent=0 // pred_fallthru
    _
  // Predicated region
  $region38: #{dpn_block_forward.3} parent=0 // pred_check
    _
  $region39: #{dpn_block_forward.3} parent=0 // pred_check_branch
    %248 = sbr.rel (0) target = $region41
  $region40: #{dpn_block_forward.3} parent=0 // pred_region
    _
  $region41: #{dpn_block_forward.3} parent=0 // pred_fallthru
    _

</llo_original>
